<compile_context>
chip_gen: v7x
topology: tpu7x:2x2x1
jax: 0.10.0
libtpu: 0.0.40
codegen_flags: <defaults>
</compile_context>

<pallas_src>
import functools

import numpy as np
import jax
import jax.numpy as jnp
from jax.experimental import pallas as pl
from jax.experimental.pallas import tpu as pltpu

EPS = 1e-8
LEVELS = 2            # forward() calls laplacian_pyramid(..., levels=2)
FACTOR = 2 ** LEVELS  # total spatial downsample factor = 4


def _round_up(x, m):
    return ((x + m - 1) // m) * m


def _vmem_limit_bytes():
    """Scoped-VMEM limit derived from the actual chip (v5e/v6e: 128 MiB, v7x: 64 MiB)."""
    cap = 64 * 1024 * 1024  # conservative default = v7x physical VMEM
    try:
        info = pltpu.get_tpu_info()
        cap = int(getattr(info, "vmem_capacity_bytes", cap))
    except Exception:
        pass
    return int(min(cap * 3 // 4, 100 * 1024 * 1024))


def _choose_tile_rows(total_rows, per_row_bytes, budget_bytes, max_tile_rows=None):
    """Largest multiple-of-8 row tile fitting the VMEM budget; cdiv grid handles the tail."""
    max_rows = max(8, budget_bytes // max(per_row_bytes, 1))
    if max_tile_rows is not None:
        max_rows = min(max_rows, max(8, int(max_tile_rows)))
    if total_rows <= max_rows:
        return total_rows                       # one full block (full dims are always legal)
    return max(8, (max_rows // 8) * 8)


# --------------------------- kernel 1: 4x4 mean pool + target fusion ---------------------------
def _pool_target_kernel(fused_ref, ir_ref, vis_ref, hp_ref, f_out_ref, t_out_ref,
                        *, strategy, width):
    W = width
    hp = hp_ref[...]

    def pool(x):
        # Vertical 4-row sum: lane-slice adds (VALU only).
        v = x[:, 0:W] + x[:, W:2 * W] + x[:, 2 * W:3 * W] + x[:, 3 * W:4 * W]
        # Horizontal mean: small (W, W/4) matmul in the native input dtype, f32 accumulate.
        return jnp.dot(v, hp, preferred_element_type=jnp.float32)

    f_out_ref[...] = pool(fused_ref[...])
    if strategy == "max":
        i_low = pool(ir_ref[...])
        v_low = pool(vis_ref[...])
        t_out_ref[...] = jnp.maximum(i_low, v_low) + jnp.maximum(i_low - v_low, 0.0)
    else:  # 'sum': pooling is linear -> pool (ir + vis) once, saving a matmul
        t_out_ref[...] = pool(ir_ref[...] + vis_ref[...])


# --------------------------- kernel 2: loss reduction over pooled slabs ---------------------------
def _loss_kernel(f_ref, t_ref, out_ref, acc_ref, *, normalize, epsilon,
                 total_rows, tile_rows, inv_n, inv_nm1):
    phase = pl.program_id(0)
    j = pl.program_id(1)
    nb = pl.num_programs(1)

    @pl.when(jnp.logical_and(phase == 0, j == 0))
    def _init():
        for k in range(9):
            acc_ref[k] = jnp.float32(0.0)

    f = f_ref[...]
    t = t_ref[...]
    # Mask rows of a partial (cdiv) last block.
    rows = jax.lax.broadcasted_iota(jnp.int32, f.shape, 0) + j * tile_rows
    valid = rows < total_rows

    if not normalize:                           # single-pass MSE
        d = jnp.where(valid, f - t, 0.0)
        acc_ref[0] = acc_ref[0] + jnp.sum(d * d)

        @pl.when(j == nb - 1)
        def _fin():
            out_ref[0, 0] = acc_ref[0] * inv_n
        return

    @pl.when(phase == 0)                        # pass 1: sums -> means
    def _p0():
        acc_ref[0] = acc_ref[0] + jnp.sum(jnp.where(valid, f, 0.0))
        acc_ref[1] = acc_ref[1] + jnp.sum(jnp.where(valid, t, 0.0))

        @pl.when(j == nb - 1)
        def _():
            acc_ref[4] = acc_ref[0] * inv_n      # mean_f
            acc_ref[5] = acc_ref[1] * inv_n      # mean_t

    @pl.when(phase == 1)                        # pass 2: centered SSQ -> unbiased std
    def _p1():
        df = jnp.where(valid, f - acc_ref[4], 0.0)
        dt = jnp.where(valid, t - acc_ref[5], 0.0)
        acc_ref[2] = acc_ref[2] + jnp.sum(df * df)
        acc_ref[3] = acc_ref[3] + jnp.sum(dt * dt)

        @pl.when(j == nb - 1)
        def _():
            acc_ref[6] = 1.0 / (jnp.sqrt(acc_ref[2] * inv_nm1) + epsilon)   # 1/(std_f+eps)
            acc_ref[7] = 1.0 / (jnp.sqrt(acc_ref[3] * inv_nm1) + epsilon)   # 1/(std_t+eps)

    @pl.when(phase == 2)                        # pass 3: normalized L1
    def _p2():
        diff = (f - acc_ref[4]) * acc_ref[6] - (t - acc_ref[5]) * acc_ref[7]
        acc_ref[8] = acc_ref[8] + jnp.sum(jnp.where(valid, jnp.abs(diff), 0.0))

        @pl.when(j == nb - 1)
        def _():
            out_ref[0, 0] = acc_ref[8] * inv_n


# --------------------------- wrapper ---------------------------
def low_frequency_loss(fused, ir, vis, *, normalize=True, low_freq_strategy="max",
                       epsilon=EPS, max_tile_rows=None, max_pooled_tile_rows=None):
    assert low_freq_strategy in ("max", "sum")
    assert fused.shape == ir.shape == vis.shape
    N, C, H, W = fused.shape
    assert H % FACTOR == 0 and W % FACTOR == 0, "levels=2 pooling needs H, W divisible by 4"

    R = N * C * H
    RP = R // FACTOR              # packed rows: one per 4-row group
    Wo = W // FACTOR              # pooled width
    Wp = FACTOR * W               # packed row width (4 image rows)
    in_dtype = jnp.dtype(fused.dtype)
    itemsize = in_dtype.itemsize

    def pack(x):
        return x.reshape(RP, Wp)  # contiguous NCHW -> free view

    # Horizontal mean-pool weights (W, W/4); 1/16 is exact in bf16/f32.
    col = np.arange(W) // FACTOR
    hp = jnp.asarray(
        (col[:, None] == np.arange(Wo)[None, :]).astype(np.float32) / (FACTOR * FACTOR),
        dtype=in_dtype)

    vmem_limit = _vmem_limit_bytes()
    lanes_in = _round_up(Wp, 128)
    lanes_out = _round_up(Wo, 128)
    lanes_mid = _round_up(W, 128)
    # Everything live per pipeline stage, per packed row:
    per_row = (3 * 2 * lanes_in * itemsize      # fused/ir/vis blocks, double-buffered
               + 2 * 2 * lanes_out * 4          # pooled f32 output blocks, double-buffered
               + 2 * lanes_mid * itemsize       # vertical-sum temporaries
               + 3 * lanes_out * 4)             # matmul result / target temporaries
    fixed = 2 * _round_up(W, 8) * lanes_out * itemsize + (2 << 20)   # weights (x2) + headroom
    block_budget = max(vmem_limit * 4 // 5 - fixed, 1 << 20)
    tile_rp = _choose_tile_rows(RP, per_row, block_budget, max_tile_rows)
    nb = pl.cdiv(RP, tile_rp)

    kernel1 = functools.partial(_pool_target_kernel, strategy=low_freq_strategy, width=W)
    n_matmuls = 3 if low_freq_strategy == "max" else 2
    cost = pl.CostEstimate(
        flops=2 * n_matmuls * RP * W * Wo + 3 * 3 * RP * W,
        transcendentals=0,
        bytes_accessed=3 * R * W * itemsize + 2 * RP * Wo * 4 + W * Wo * itemsize)

    f_low, t_low = pl.pallas_call(
        kernel1,
        out_shape=(jax.ShapeDtypeStruct((RP, Wo), jnp.float32),
                   jax.ShapeDtypeStruct((RP, Wo), jnp.float32)),
        grid=(nb,),
        in_specs=[pl.BlockSpec((tile_rp, Wp), lambda i: (i, 0)),
                  pl.BlockSpec((tile_rp, Wp), lambda i: (i, 0)),
                  pl.BlockSpec((tile_rp, Wp), lambda i: (i, 0)),
                  pl.BlockSpec((W, Wo), lambda i: (0, 0))],      # pool weights, resident
        out_specs=(pl.BlockSpec((tile_rp, Wo), lambda i: (i, 0)),
                   pl.BlockSpec((tile_rp, Wo), lambda i: (i, 0))),
        compiler_params=pltpu.CompilerParams(
            dimension_semantics=("parallel",),      # blocks independent -> 2-TC split on v7x
            vmem_limit_bytes=vmem_limit),
        cost_estimate=cost,
    )(pack(fused), pack(ir), pack(vis), hp)

    # -------- loss reduction over the 16x-smaller pooled slabs --------
    n_pooled = RP * Wo
    inv_n = 1.0 / float(n_pooled)
    inv_nm1 = 1.0 / float(max(n_pooled - 1, 1))     # torch .std() is unbiased (n-1)

    per_row2 = (2 * 2 + 2) * lanes_out * 4
    tile2 = _choose_tile_rows(RP, per_row2, block_budget, max_pooled_tile_rows)
    nb2 = pl.cdiv(RP, tile2)
    phases = 3 if normalize else 1

    # TODO(synk): when Wo < 128 the pooled stores/loads are lane-masked (vst.msk); packing
    # multiple row-groups per pooled row would make them lane-dense, but the pooled slabs
    # are already 16x smaller than the inputs so the traffic is minor.
    kernel2 = functools.partial(_loss_kernel, normalize=normalize, epsilon=float(epsilon),
                                total_rows=RP, tile_rows=tile2, inv_n=inv_n, inv_nm1=inv_nm1)
    loss = pl.pallas_call(
        kernel2,
        out_shape=jax.ShapeDtypeStruct((1, 1), jnp.float32),
        grid=(phases, nb2),
        in_specs=[pl.BlockSpec((tile2, Wo), lambda p, j: (j, 0)),
                  pl.BlockSpec((tile2, Wo), lambda p, j: (j, 0))],
        out_specs=pl.BlockSpec(memory_space=pltpu.MemorySpace.SMEM),
        scratch_shapes=[pltpu.SMEM((9,), jnp.float32)],
        compiler_params=pltpu.CompilerParams(
            dimension_semantics=("arbitrary", "arbitrary"),
            vmem_limit_bytes=vmem_limit),
    )(f_low, t_low)
    return loss[0, 0]


# ---------------- pure-JAX reference (mirrors the PyTorch forward) ----------------
def _avg_pool2(x):
    n, c, h, w = x.shape
    return x.reshape(n, c, h // 2, 2, w // 2, 2).mean(axis=(3, 5))


def _reference(fused, ir, vis, normalize=True, strategy="max", epsilon=EPS):
    def low(x):
        return _avg_pool2(_avg_pool2(x))   # high-freq residuals unused by forward()
    f, i, v = low(fused), low(ir), low(vis)
    t = jnp.maximum(i, v) + jax.nn.relu(i - v) if strategy == "max" else i + v
    if normalize:
        def norm(x):
            return (x - x.mean()) / (jnp.std(x, ddof=1) + epsilon)
        return jnp.mean(jnp.abs(norm(f) - norm(t)))
    return jnp.mean((f - t) ** 2)


if __name__ == "__main__":
    key = jax.random.PRNGKey(0)
    k1, k2, k3, k4, k5, k6 = jax.random.split(key, 6)

    # Test 1: module-sized toy input, default path (normalize=True, strategy='max').
    shape = (2, 4, 16, 16)   # NCHW
    fused = jax.random.normal(k1, shape, dtype=jnp.float32)
    ir = jax.random.normal(k2, shape, dtype=jnp.float32)
    vis = jax.random.normal(k3, shape, dtype=jnp.float32)
    loss = jax.block_until_ready(low_frequency_loss(fused, ir, vis))
    ref = jax.block_until_ready(_reference(fused, ir, vis))
    assert np.allclose(np.asarray(loss), np.asarray(ref), rtol=1e-4, atol=1e-5), (loss, ref)

    # Test 2: multi-block grid with a PARTIAL last block in both kernels
    # (64 packed rows, tile of 24 -> cdiv grid; tail rows dropped / masked).
    shape2 = (2, 4, 32, 32)
    fused2 = jax.random.normal(k4, shape2, dtype=jnp.float32)
    ir2 = jax.random.normal(k5, shape2, dtype=jnp.float32)
    vis2 = jax.random.normal(k6, shape2, dtype=jnp.float32)
    loss2 = jax.block_until_ready(
        low_frequency_loss(fused2, ir2, vis2, max_tile_rows=24, max_pooled_tile_rows=24))
    ref2 = jax.block_until_ready(_reference(fused2, ir2, vis2))
    assert np.allclose(np.asarray(loss2), np.asarray(ref2), rtol=1e-4, atol=1e-5), (loss2, ref2)

    # Test 3: MSE path (normalize=False), tiled.
    loss3 = jax.block_until_ready(
        low_frequency_loss(fused2, ir2, vis2, normalize=False, max_tile_rows=16,
                           max_pooled_tile_rows=16))
    ref3 = jax.block_until_ready(_reference(fused2, ir2, vis2, normalize=False))
    assert np.allclose(np.asarray(loss3), np.asarray(ref3), rtol=1e-4, atol=1e-5), (loss3, ref3)

    # Test 4: 'sum' strategy (single pooled matmul for the target).
    loss4 = jax.block_until_ready(
        low_frequency_loss(fused2, ir2, vis2, low_freq_strategy="sum", max_tile_rows=16))
    ref4 = jax.block_until_ready(_reference(fused2, ir2, vis2, strategy="sum"))
    assert np.allclose(np.asarray(loss4), np.asarray(ref4), rtol=1e-4, atol=1e-5), (loss4, ref4)

    # Test 5: bf16 inputs take the native bf16 MXU path (sanity: runs and is finite).
    loss5 = jax.block_until_ready(
        low_frequency_loss(fused.astype(jnp.bfloat16), ir.astype(jnp.bfloat16),
                           vis.astype(jnp.bfloat16)))
    assert np.isfinite(float(loss5)), loss5

    print("KERNEL_OK")
</pallas_src>

<mosaic_0001>
module attributes {stable_mosaic.version = 11 : i64} {
  func.func @_pool_target_kernel(%arg0: i32, %arg1: memref<32x64xf32, #tpu.memory_space<vmem>>, %arg2: memref<32x64xf32, #tpu.memory_space<vmem>>, %arg3: memref<32x64xf32, #tpu.memory_space<vmem>>, %arg4: memref<16x4xf32, #tpu.memory_space<vmem>>, %arg5: memref<32x4xf32, #tpu.memory_space<vmem>>, %arg6: memref<32x4xf32, #tpu.memory_space<vmem>>) attributes {dimension_semantics = [#tpu.dimension_semantics<parallel>], iteration_bounds = array<i64: 1>, scalar_prefetch = 0 : i64, scratch_operands = 0 : i64, tpu.core_type = #tpu.core_type<tc>, window_params = [{transform_indices = @transform_0, window_bounds = array<i64: 32, 64>}, {transform_indices = @transform_1, window_bounds = array<i64: 32, 64>}, {transform_indices = @transform_2, window_bounds = array<i64: 32, 64>}, {pipeline_mode = #tpu.pipeline_mode<synchronous>, transform_indices = @transform_3, window_bounds = array<i64: 16, 4>}, {transform_indices = @transform_4, window_bounds = array<i64: 32, 4>}, {transform_indices = @transform_5, window_bounds = array<i64: 32, 4>}]} {
    %c0 = arith.constant 0 : index
    %c0_0 = arith.constant 0 : index
    %0 = vector.load %arg4[%c0, %c0_0] : memref<16x4xf32, #tpu.memory_space<vmem>>, vector<16x4xf32>
    %c0_1 = arith.constant 0 : index
    %c0_2 = arith.constant 0 : index
    %1 = vector.load %arg1[%c0_1, %c0_2] : memref<32x64xf32, #tpu.memory_space<vmem>>, vector<32x64xf32>
    %2 = vector.extract_strided_slice %1 {offsets = [0, 0], sizes = [32, 16], strides = [1, 1]} : vector<32x64xf32> to vector<32x16xf32>
    %3 = vector.extract_strided_slice %1 {offsets = [0, 16], sizes = [32, 16], strides = [1, 1]} : vector<32x64xf32> to vector<32x16xf32>
    %4 = arith.addf %2, %3 : vector<32x16xf32>
    %5 = vector.extract_strided_slice %1 {offsets = [0, 32], sizes = [32, 16], strides = [1, 1]} : vector<32x64xf32> to vector<32x16xf32>
    %6 = arith.addf %4, %5 : vector<32x16xf32>
    %7 = vector.extract_strided_slice %1 {offsets = [0, 48], sizes = [32, 16], strides = [1, 1]} : vector<32x64xf32> to vector<32x16xf32>
    %8 = arith.addf %6, %7 : vector<32x16xf32>
    %cst = arith.constant dense<0.000000e+00> : vector<32x4xf32>
    %9 = tpu.matmul %8, %0, %cst {dimension_numbers = #tpu.dot_dimension_numbers<[1], [0], [0], [1], [0, 0, 1, 1], [], []>} : vector<32x16xf32>, vector<16x4xf32>, vector<32x4xf32> -> vector<32x4xf32>
    %c0_3 = arith.constant 0 : index
    %c0_4 = arith.constant 0 : index
    %10 = vector.load %arg5[%c0_3, %c0_4] : memref<32x4xf32, #tpu.memory_space<vmem>>, vector<32x4xf32>
    tpu.vector_store %arg5[%c0_3, %c0_4], %9 {strides = array<i32>} : memref<32x4xf32, #tpu.memory_space<vmem>>, vector<32x4xf32>,
    %c0_5 = arith.constant 0 : index
    %c0_6 = arith.constant 0 : index
    %11 = vector.load %arg2[%c0_5, %c0_6] : memref<32x64xf32, #tpu.memory_space<vmem>>, vector<32x64xf32>
    %12 = vector.extract_strided_slice %11 {offsets = [0, 0], sizes = [32, 16], strides = [1, 1]} : vector<32x64xf32> to vector<32x16xf32>
    %13 = vector.extract_strided_slice %11 {offsets = [0, 16], sizes = [32, 16], strides = [1, 1]} : vector<32x64xf32> to vector<32x16xf32>
    %14 = arith.addf %12, %13 : vector<32x16xf32>
    %15 = vector.extract_strided_slice %11 {offsets = [0, 32], sizes = [32, 16], strides = [1, 1]} : vector<32x64xf32> to vector<32x16xf32>
    %16 = arith.addf %14, %15 : vector<32x16xf32>
    %17 = vector.extract_strided_slice %11 {offsets = [0, 48], sizes = [32, 16], strides = [1, 1]} : vector<32x64xf32> to vector<32x16xf32>
    %18 = arith.addf %16, %17 : vector<32x16xf32>
    %cst_7 = arith.constant dense<0.000000e+00> : vector<32x4xf32>
    %19 = tpu.matmul %18, %0, %cst_7 {dimension_numbers = #tpu.dot_dimension_numbers<[1], [0], [0], [1], [0, 0, 1, 1], [], []>} : vector<32x16xf32>, vector<16x4xf32>, vector<32x4xf32> -> vector<32x4xf32>
    %c0_8 = arith.constant 0 : index
    %c0_9 = arith.constant 0 : index
    %20 = vector.load %arg3[%c0_8, %c0_9] : memref<32x64xf32, #tpu.memory_space<vmem>>, vector<32x64xf32>
    %21 = vector.extract_strided_slice %20 {offsets = [0, 0], sizes = [32, 16], strides = [1, 1]} : vector<32x64xf32> to vector<32x16xf32>
    %22 = vector.extract_strided_slice %20 {offsets = [0, 16], sizes = [32, 16], strides = [1, 1]} : vector<32x64xf32> to vector<32x16xf32>
    %23 = arith.addf %21, %22 : vector<32x16xf32>
    %24 = vector.extract_strided_slice %20 {offsets = [0, 32], sizes = [32, 16], strides = [1, 1]} : vector<32x64xf32> to vector<32x16xf32>
    %25 = arith.addf %23, %24 : vector<32x16xf32>
    %26 = vector.extract_strided_slice %20 {offsets = [0, 48], sizes = [32, 16], strides = [1, 1]} : vector<32x64xf32> to vector<32x16xf32>
    %27 = arith.addf %25, %26 : vector<32x16xf32>
    %cst_10 = arith.constant dense<0.000000e+00> : vector<32x4xf32>
    %28 = tpu.matmul %27, %0, %cst_10 {dimension_numbers = #tpu.dot_dimension_numbers<[1], [0], [0], [1], [0, 0, 1, 1], [], []>} : vector<32x16xf32>, vector<16x4xf32>, vector<32x4xf32> -> vector<32x4xf32>
    %29 = arith.maximumf %19, %28 : vector<32x4xf32>
    %30 = arith.subf %19, %28 : vector<32x4xf32>
    %cst_11 = arith.constant 0.000000e+00 : f32
    %31 = vector.broadcast %cst_11 : f32 to vector<32x4xf32>
    %32 = arith.maximumf %30, %31 : vector<32x4xf32>
    %33 = arith.addf %29, %32 : vector<32x4xf32>
    %c0_12 = arith.constant 0 : index
    %c0_13 = arith.constant 0 : index
    %34 = vector.load %arg6[%c0_12, %c0_13] : memref<32x4xf32, #tpu.memory_space<vmem>>, vector<32x4xf32>
    tpu.vector_store %arg6[%c0_12, %c0_13], %33 {strides = array<i32>} : memref<32x4xf32, #tpu.memory_space<vmem>>, vector<32x4xf32>,
    return
  }
  func.func @transform_0(%arg0: i32) -> (i32, i32) {
    %c0_i32 = arith.constant 0 : i32
    %c0_i32_0 = arith.constant 0 : i32
    return %arg0, %c0_i32 : i32, i32
  }
  func.func @transform_1(%arg0: i32) -> (i32, i32) {
    %c0_i32 = arith.constant 0 : i32
    %c0_i32_0 = arith.constant 0 : i32
    return %arg0, %c0_i32 : i32, i32
  }
  func.func @transform_2(%arg0: i32) -> (i32, i32) {
    %c0_i32 = arith.constant 0 : i32
    %c0_i32_0 = arith.constant 0 : i32
    return %arg0, %c0_i32 : i32, i32
  }
  func.func @transform_3(%arg0: i32) -> (i32, i32) {
    %c0_i32 = arith.constant 0 : i32
    %c0_i32_0 = arith.constant 0 : i32
    %c0_i32_1 = arith.constant 0 : i32
    return %c0_i32, %c0_i32_0 : i32, i32
  }
  func.func @transform_4(%arg0: i32) -> (i32, i32) {
    %c0_i32 = arith.constant 0 : i32
    %c0_i32_0 = arith.constant 0 : i32
    return %arg0, %c0_i32 : i32, i32
  }
  func.func @transform_5(%arg0: i32) -> (i32, i32) {
    %c0_i32 = arith.constant 0 : i32
    %c0_i32_0 = arith.constant 0 : i32
    return %arg0, %c0_i32 : i32, i32
  }
}

</mosaic_0001>

<llo_original>
// kernel: tpu_custom_call.1
$region0: #{tpu_custom_call.1}
  #allocation0 [shape = 'u32[]', space=smem, size = 0x4, offset = 0x4, fixed_abs, tag = 'smem constant byte address 0x4 - core index']
  #allocation1 [shape = 'u32[144,128]{1,0:T(1,128)}', space=vmem, size = 0x12000, scoped, tag = 'internal scratch']
  %s0 = inlined_call_operand.hbm [shape: f32[32,64], index: 0, kind: input, shape index: {}]
  %s1 = inlined_call_operand.hbm [shape: f32[32,64], index: 1, kind: input, shape index: {}]
  %s2 = inlined_call_operand.hbm [shape: f32[32,64], index: 2, kind: input, shape index: {}]
  %s3 = inlined_call_operand.vmem [shape: f32[16,4], index: 3, kind: input, shape index: {}]
  %s4 = inlined_call_operand.vmem [shape: f32[32,4], index: 4, kind: output, shape index: {0}]
  %s5 = inlined_call_operand.vmem [shape: f32[32,4], index: 5, kind: output, shape index: {1}]
  %6 = xla_tuple %s4, %s5
  %s7 = sld [smem:[#allocation0]]
  $region46: #{tpu_custom_call.1} parent=0
    _
  %s9 = ssub.s32 1, %s7
  %s10 = scalar_select 0, %s9, %s7
  $region1: #{tpu_custom_call.1} parent=0
    #allocation2 [shape = 'u8[16384]{0}', space=vmem, size = 0x4000, scoped, tag = 'input window, operand 0, single buffered']
    #allocation3 [shape = 's32[1]{0}', space=sflag, size = 0x4, scoped, tag = 'scoped memory for tpu_custom_call.1']
    #allocation4 [shape = 'u8[16384]{0}', space=vmem, size = 0x4000, scoped, tag = 'input window, operand 1, single buffered']
    #allocation5 [shape = 's32[1]{0}', space=sflag, size = 0x4, scoped, tag = 'scoped memory for tpu_custom_call.1']
    #allocation6 [shape = 'u8[16384]{0}', space=vmem, size = 0x4000, scoped, tag = 'input window, operand 2, single buffered']
    %11 = vsyncpa [#allocation3], 0
    %12 = vsyncpa [#allocation5], 0
    // Predicated region
    $region2: #{tpu_custom_call.1} parent=1 // pred_check
      _
    $region3: #{tpu_custom_call.1} parent=1 // pred_check_branch
      %14 = sbr.rel (0) target = $region5
    $region4: #{tpu_custom_call.1} parent=1 // pred_region
      %s16 = ssub.s32 512, 512
      %17 = vsyncadd [#allocation3], %s16
      %s18 = sshll.u32 [#allocation2], 4
      %s19 = int_to_ptr.vmem [resolvable:$true] %s18
      %24 = dma.hbm_to_vmem [thread:$0]  %s0, 512, %s19, [#allocation3], 128, 128, 8
    $region5: #{tpu_custom_call.1} parent=1 // pred_fallthru
      _
    // Predicated region
    $region6: #{tpu_custom_call.1} parent=1 // pred_check
      _
    $region7: #{tpu_custom_call.1} parent=1 // pred_check_branch
      %26 = sbr.rel (0) target = $region9
    $region8: #{tpu_custom_call.1} parent=1 // pred_region
      %s28 = ssub.s32 512, 512
      %29 = vsyncadd [#allocation5], %s28
      %s30 = sshll.u32 [#allocation4], 4
      %s31 = int_to_ptr.vmem [resolvable:$true] %s30
      %36 = dma.hbm_to_vmem [thread:$0]  %s1, 512, %s31, [#allocation5], 128, 128, 8
    $region9: #{tpu_custom_call.1} parent=1 // pred_fallthru
      _
    // Predicated region
    $region10: #{tpu_custom_call.1} parent=1 // pred_check
      _
    $region11: #{tpu_custom_call.1} parent=1 // pred_check_branch
      %38 = sbr.rel (0) target = $region13
    $region12: #{tpu_custom_call.1} parent=1 // pred_region
      %s40 = ssub.s32 512, 512
      %41 = vsyncadd [#allocation5], %s40
      %s42 = sshll.u32 [#allocation6], 4
      %s43 = int_to_ptr.vmem [resolvable:$true] %s42
      %48 = dma.hbm_to_vmem [thread:$0]  %s2, 512, %s43, [#allocation5], 128, 128, 8
    $region13: #{tpu_custom_call.1} parent=1 // pred_fallthru
      _
    // Predicated region
    $region14: #{tpu_custom_call.1} parent=1 // pred_check
      _
    $region15: #{tpu_custom_call.1} parent=1 // pred_check_branch
      %50 = sbr.rel (0) target = $region17
    $region16: #{tpu_custom_call.1} parent=1 // pred_region
      _
    $region17: #{tpu_custom_call.1} parent=1 // pred_fallthru
      _
    // Predicated region
    $region18: #{tpu_custom_call.1} parent=1 // pred_check
      _
    $region19: #{tpu_custom_call.1} parent=1 // pred_check_branch
      %52 = sbr.rel (0) target = $region21
    $region20: #{tpu_custom_call.1} parent=1 // pred_region
      %53 = dma.done [#allocation3], 512
    $region21: #{tpu_custom_call.1} parent=1 // pred_fallthru
      _
    // Predicated region
    $region22: #{tpu_custom_call.1} parent=1 // pred_check
      _
    $region23: #{tpu_custom_call.1} parent=1 // pred_check_branch
      %55 = sbr.rel (0) target = $region25
    $region24: #{tpu_custom_call.1} parent=1 // pred_region
      %56 = dma.done [#allocation5], 512
    $region25: #{tpu_custom_call.1} parent=1 // pred_fallthru
      _
    // Predicated region
    $region26: #{tpu_custom_call.1} parent=1 // pred_check
      _
    $region27: #{tpu_custom_call.1} parent=1 // pred_check_branch
      %58 = sbr.rel (0) target = $region29
    $region28: #{tpu_custom_call.1} parent=1 // pred_region
      %59 = dma.done [#allocation5], 512
    $region29: #{tpu_custom_call.1} parent=1 // pred_fallthru
      _
    %v60 = vld [vmem:[%s3] sm:$0xff]
    %v61 = vld [vmem:[%s3 + $0x8] sm:$0xff]
    %v62 = vld [vmem:[#allocation2] sm:$0xff]
    %v63 = vld [vmem:[#allocation2 + $0x8] sm:$0xff]
    %v64 = vld [vmem:[#allocation2 + $0x10] sm:$0xff]
    %v65 = vld [vmem:[#allocation2 + $0x18] sm:$0xff]
    %70 = vrot.lane.b32.xlu0 %v62, 112
    %v71 = vpop.permute.xlu0 %70
    %72 = vrot.lane.b32.xlu0 %v63, 112
    %v73 = vpop.permute.xlu0 %72
    %74 = vrot.lane.b32.xlu0 %v64, 112
    %v75 = vpop.permute.xlu0 %74
    %76 = vrot.lane.b32.xlu0 %v65, 112
    %v77 = vpop.permute.xlu0 %76
    %v82 = vadd.f32 %v62, %v71
    %v83 = vadd.f32 %v63, %v73
    %v84 = vadd.f32 %v64, %v75
    %v85 = vadd.f32 %v65, %v77
    %86 = vrot.lane.b32.xlu0 %v62, 96
    %v87 = vpop.permute.xlu0 %86
    %88 = vrot.lane.b32.xlu0 %v63, 96
    %v89 = vpop.permute.xlu0 %88
    %90 = vrot.lane.b32.xlu0 %v64, 96
    %v91 = vpop.permute.xlu0 %90
    %92 = vrot.lane.b32.xlu0 %v65, 96
    %v93 = vpop.permute.xlu0 %92
    %v98 = vadd.f32 %v82, %v87
    %v99 = vadd.f32 %v83, %v89
    %v100 = vadd.f32 %v84, %v91
    %v101 = vadd.f32 %v85, %v93
    %102 = vrot.lane.b32.xlu0 %v62, 80
    %v103 = vpop.permute.xlu0 %102
    %104 = vrot.lane.b32.xlu0 %v63, 80
    %v105 = vpop.permute.xlu0 %104
    %106 = vrot.lane.b32.xlu0 %v64, 80
    %v107 = vpop.permute.xlu0 %106
    %108 = vrot.lane.b32.xlu0 %v65, 80
    %v109 = vpop.permute.xlu0 %108
    %v114 = vadd.f32 %v98, %v103
    %v115 = vadd.f32 %v99, %v105
    %v116 = vadd.f32 %v100, %v107
    %v117 = vadd.f32 %v101, %v109
    %vm118 = vcmask 130048
    %v120 = vsel %vm118, %v114, 0
    %v123 = vsel %vm118, %v115, 0
    %v126 = vsel %vm118, %v116, 0
    %v129 = vsel %vm118, %v117, 0
    %131 = vmatprep.subr.mxu0 0.0
    %132 = vmatpush1.msra.mxu0 %v60
    %133 = vmatprep.subr.mxu0 0.0
    %134 = vmatpush1.msra.mxu0 %v61
    %135 = vmatprep.subr.mxu0 0.0
    %136 = vmatpush1.msra.mxu0 0.0
    %137 = vmatprep.subr.mxu0 0.0
    %138 = vmatpush1.msra.mxu0 0.0
    %139 = vmatprep.subr.mxu0 0.0
    %140 = vmatpush1.msra.mxu0 0.0
    %141 = vmatprep.subr.mxu0 0.0
    %142 = vmatpush1.msra.mxu0 0.0
    %143 = vmatprep.subr.mxu0 0.0
    %144 = vmatpush1.msra.mxu0 0.0
    %145 = vmatprep.subr.mxu0 0.0
    %146 = vmatpush1.msra.mxu0 0.0
    %147 = vmatprep.subr.mxu0 0.0
    %148 = vmatpush1.msra.mxu0 0.0
    %149 = vmatprep.subr.mxu0 0.0
    %150 = vmatpush1.msra.mxu0 0.0
    %151 = vmatprep.subr.mxu0 0.0
    %152 = vmatpush1.msra.mxu0 0.0
    %153 = vmatprep.subr.mxu0 0.0
    %154 = vmatpush1.msra.mxu0 0.0
    %155 = vmatprep.subr.mxu0 0.0
    %156 = vmatpush1.msra.mxu0 0.0
    %157 = vmatprep.subr.mxu0 0.0
    %158 = vmatpush1.msra.mxu0 0.0
    %159 = vmatprep.subr.mxu0 0.0
    %160 = vmatpush1.msra.mxu0 0.0
    %161 = vmatprep.subr.mxu0 0.0
    %162 = vmatpush1.msra.mxu0 0.0
    %163 = vmatprep.subr.mxu0 0.0
    %164 = vmatpush1.msra.mxu0 0.0
    %165 = vmatprep.subr.mxu0 0.0
    %166 = vmatpush1.msra.mxu0 0.0
    %167 = vmatprep.subr.mxu0 0.0
    %168 = vmatpush1.msra.mxu0 0.0
    %169 = vmatprep.subr.mxu0 0.0
    %170 = vmatpush1.msra.mxu0 0.0
    %171 = vmatprep.subr.mxu0 0.0
    %172 = vmatpush1.msra.mxu0 0.0
    %173 = vmatprep.subr.mxu0 0.0
    %174 = vmatpush1.msra.mxu0 0.0
    %175 = vmatprep.subr.mxu0 0.0
    %176 = vmatpush1.msra.mxu0 0.0
    %177 = vmatprep.subr.mxu0 0.0
    %178 = vmatpush1.msra.mxu0 0.0
    %179 = vmatprep.subr.mxu0 0.0
    %180 = vmatpush1.msra.mxu0 0.0
    %181 = vmatprep.subr.mxu0 0.0
    %182 = vmatpush1.msra.mxu0 0.0
    %183 = vmatprep.subr.mxu0 0.0
    %184 = vmatpush1.msra.mxu0 0.0
    %185 = vmatprep.subr.mxu0 0.0
    %186 = vmatpush1.msra.mxu0 0.0
    %187 = vmatprep.subr.mxu0 0.0
    %188 = vmatpush1.msra.mxu0 0.0
    %189 = vmatprep.subr.mxu0 0.0
    %190 = vmatpush1.msra.mxu0 0.0
    %191 = vmatprep.subr.mxu0 0.0
    %192 = vmatpush1.msra.mxu0 0.0
    %193 = vmatprep.subr.mxu0 0.0
    %194 = vmatpush1.msra.mxu0 0.0
    %195 = vmatprep.mubr.f32.mxu0 0.0
    %196 = vmatmul.mubr.f32.gmra.mrb[0].mxu0 %v120
    %v197 = vpop.f32.mrb[0].mxu0
    %v198 = vadd.f32 0.0, %v197
    %v199 = vpop.f32.mrb[0].mxu0
    %200 = vmatprep.mubr.f32.mxu0 0.0
    %201 = vmatmul.mubr.f32.gmra.mrb[0].mxu0 %v123
    %v202 = vpop.f32.mrb[0].mxu0
    %v203 = vadd.f32 0.0, %v202
    %v204 = vpop.f32.mrb[0].mxu0
    %205 = vmatprep.mubr.f32.mxu0 0.0
    %206 = vmatmul.mubr.f32.gmra.mrb[0].mxu0 %v126
    %v207 = vpop.f32.mrb[0].mxu0
    %v208 = vadd.f32 0.0, %v207
    %v209 = vpop.f32.mrb[0].mxu0
    %210 = vmatprep.mubr.f32.mxu0 0.0
    %211 = vmatmul.mubr.f32.gmra.mrb[0].mxu0 %v129
    %v212 = vpop.f32.mrb[0].mxu0
    %v213 = vadd.f32 0.0, %v212
    %v214 = vpop.f32.mrb[0].mxu0
    %215 = vdwg.mxu0
    %vm216 = vcmask 31744
    %217 = vst.msk [vmem:[%s4] sm:$0xff] %vm216, %v198
    %218 = vst.msk [vmem:[%s4 + $0x8] sm:$0xff] %vm216, %v203
    %219 = vst.msk [vmem:[%s4 + $0x10] sm:$0xff] %vm216, %v208
    %220 = vst.msk [vmem:[%s4 + $0x18] sm:$0xff] %vm216, %v213
    %v221 = vld [vmem:[#allocation4] sm:$0xff]
    %v222 = vld [vmem:[#allocation4 + $0x8] sm:$0xff]
    %v223 = vld [vmem:[#allocation4 + $0x10] sm:$0xff]
    %v224 = vld [vmem:[#allocation4 + $0x18] sm:$0xff]
    %229 = vrot.lane.b32.xlu0 %v221, 112
    %v230 = vpop.permute.xlu0 %229
    %231 = vrot.lane.b32.xlu0 %v222, 112
    %v232 = vpop.permute.xlu0 %231
    %233 = vrot.lane.b32.xlu0 %v223, 112
    %v234 = vpop.permute.xlu0 %233
    %235 = vrot.lane.b32.xlu0 %v224, 112
    %v236 = vpop.permute.xlu0 %235
    %v241 = vadd.f32 %v221, %v230
    %v242 = vadd.f32 %v222, %v232
    %v243 = vadd.f32 %v223, %v234
    %v244 = vadd.f32 %v224, %v236
    %245 = vrot.lane.b32.xlu0 %v221, 96
    %v246 = vpop.permute.xlu0 %245
    %247 = vrot.lane.b32.xlu0 %v222, 96
    %v248 = vpop.permute.xlu0 %247
    %249 = vrot.lane.b32.xlu0 %v223, 96
    %v250 = vpop.permute.xlu0 %249
    %251 = vrot.lane.b32.xlu0 %v224, 96
    %v252 = vpop.permute.xlu0 %251
    %v257 = vadd.f32 %v241, %v246
    %v258 = vadd.f32 %v242, %v248
    %v259 = vadd.f32 %v243, %v250
    %v260 = vadd.f32 %v244, %v252
    %261 = vrot.lane.b32.xlu0 %v221, 80
    %v262 = vpop.permute.xlu0 %261
    %263 = vrot.lane.b32.xlu0 %v222, 80
    %v264 = vpop.permute.xlu0 %263
    %265 = vrot.lane.b32.xlu0 %v223, 80
    %v266 = vpop.permute.xlu0 %265
    %267 = vrot.lane.b32.xlu0 %v224, 80
    %v268 = vpop.permute.xlu0 %267
    %v273 = vadd.f32 %v257, %v262
    %v274 = vadd.f32 %v258, %v264
    %v275 = vadd.f32 %v259, %v266
    %v276 = vadd.f32 %v260, %v268
    %v278 = vsel %vm118, %v273, 0
    %v281 = vsel %vm118, %v274, 0
    %v284 = vsel %vm118, %v275, 0
    %v287 = vsel %vm118, %v276, 0
    %289 = vmatprep.subr.mxu0 0.0
    %290 = vmatpush1.msra.mxu0 %v60
    %291 = vmatprep.subr.mxu0 0.0
    %292 = vmatpush1.msra.mxu0 %v61
    %293 = vmatprep.subr.mxu0 0.0
    %294 = vmatpush1.msra.mxu0 0.0
    %295 = vmatprep.subr.mxu0 0.0
    %296 = vmatpush1.msra.mxu0 0.0
    %297 = vmatprep.subr.mxu0 0.0
    %298 = vmatpush1.msra.mxu0 0.0
    %299 = vmatprep.subr.mxu0 0.0
    %300 = vmatpush1.msra.mxu0 0.0
    %301 = vmatprep.subr.mxu0 0.0
    %302 = vmatpush1.msra.mxu0 0.0
    %303 = vmatprep.subr.mxu0 0.0
    %304 = vmatpush1.msra.mxu0 0.0
    %305 = vmatprep.subr.mxu0 0.0
    %306 = vmatpush1.msra.mxu0 0.0
    %307 = vmatprep.subr.mxu0 0.0
    %308 = vmatpush1.msra.mxu0 0.0
    %309 = vmatprep.subr.mxu0 0.0
    %310 = vmatpush1.msra.mxu0 0.0
    %311 = vmatprep.subr.mxu0 0.0
    %312 = vmatpush1.msra.mxu0 0.0
    %313 = vmatprep.subr.mxu0 0.0
    %314 = vmatpush1.msra.mxu0 0.0
    %315 = vmatprep.subr.mxu0 0.0
    %316 = vmatpush1.msra.mxu0 0.0
    %317 = vmatprep.subr.mxu0 0.0
    %318 = vmatpush1.msra.mxu0 0.0
    %319 = vmatprep.subr.mxu0 0.0
    %320 = vmatpush1.msra.mxu0 0.0
    %321 = vmatprep.subr.mxu0 0.0
    %322 = vmatpush1.msra.mxu0 0.0
    %323 = vmatprep.subr.mxu0 0.0
    %324 = vmatpush1.msra.mxu0 0.0
    %325 = vmatprep.subr.mxu0 0.0
    %326 = vmatpush1.msra.mxu0 0.0
    %327 = vmatprep.subr.mxu0 0.0
    %328 = vmatpush1.msra.mxu0 0.0
    %329 = vmatprep.subr.mxu0 0.0
    %330 = vmatpush1.msra.mxu0 0.0
    %331 = vmatprep.subr.mxu0 0.0
    %332 = vmatpush1.msra.mxu0 0.0
    %333 = vmatprep.subr.mxu0 0.0
    %334 = vmatpush1.msra.mxu0 0.0
    %335 = vmatprep.subr.mxu0 0.0
    %336 = vmatpush1.msra.mxu0 0.0
    %337 = vmatprep.subr.mxu0 0.0
    %338 = vmatpush1.msra.mxu0 0.0
    %339 = vmatprep.subr.mxu0 0.0
    %340 = vmatpush1.msra.mxu0 0.0
    %341 = vmatprep.subr.mxu0 0.0
    %342 = vmatpush1.msra.mxu0 0.0
    %343 = vmatprep.subr.mxu0 0.0
    %344 = vmatpush1.msra.mxu0 0.0
    %345 = vmatprep.subr.mxu0 0.0
    %346 = vmatpush1.msra.mxu0 0.0
    %347 = vmatprep.subr.mxu0 0.0
    %348 = vmatpush1.msra.mxu0 0.0
    %349 = vmatprep.subr.mxu0 0.0
    %350 = vmatpush1.msra.mxu0 0.0
    %351 = vmatprep.subr.mxu0 0.0
    %352 = vmatpush1.msra.mxu0 0.0
    %353 = vmatprep.mubr.f32.mxu0 0.0
    %354 = vmatmul.mubr.f32.gmra.mrb[0].mxu0 %v278
    %v355 = vpop.f32.mrb[0].mxu0
    %v356 = vadd.f32 0.0, %v355
    %v357 = vpop.f32.mrb[0].mxu0
    %358 = vmatprep.mubr.f32.mxu0 0.0
    %359 = vmatmul.mubr.f32.gmra.mrb[0].mxu0 %v281
    %v360 = vpop.f32.mrb[0].mxu0
    %v361 = vadd.f32 0.0, %v360
    %v362 = vpop.f32.mrb[0].mxu0
    %363 = vmatprep.mubr.f32.mxu0 0.0
    %364 = vmatmul.mubr.f32.gmra.mrb[0].mxu0 %v284
    %v365 = vpop.f32.mrb[0].mxu0
    %v366 = vadd.f32 0.0, %v365
    %v367 = vpop.f32.mrb[0].mxu0
    %368 = vmatprep.mubr.f32.mxu0 0.0
    %369 = vmatmul.mubr.f32.gmra.mrb[0].mxu0 %v287
    %v370 = vpop.f32.mrb[0].mxu0
    %v371 = vadd.f32 0.0, %v370
    %v372 = vpop.f32.mrb[0].mxu0
    %373 = vdwg.mxu0
    %v374 = vld [vmem:[#allocation6] sm:$0xff]
    %v375 = vld [vmem:[#allocation6 + $0x8] sm:$0xff]
    %v376 = vld [vmem:[#allocation6 + $0x10] sm:$0xff]
    %v377 = vld [vmem:[#allocation6 + $0x18] sm:$0xff]
    %382 = vrot.lane.b32.xlu0 %v374, 112
    %v383 = vpop.permute.xlu0 %382
    %384 = vrot.lane.b32.xlu0 %v375, 112
    %v385 = vpop.permute.xlu0 %384
    %386 = vrot.lane.b32.xlu0 %v376, 112
    %v387 = vpop.permute.xlu0 %386
    %388 = vrot.lane.b32.xlu0 %v377, 112
    %v389 = vpop.permute.xlu0 %388
    %v394 = vadd.f32 %v374, %v383
    %v395 = vadd.f32 %v375, %v385
    %v396 = vadd.f32 %v376, %v387
    %v397 = vadd.f32 %v377, %v389
    %398 = vrot.lane.b32.xlu0 %v374, 96
    %v399 = vpop.permute.xlu0 %398
    %400 = vrot.lane.b32.xlu0 %v375, 96
    %v401 = vpop.permute.xlu0 %400
    %402 = vrot.lane.b32.xlu0 %v376, 96
    %v403 = vpop.permute.xlu0 %402
    %404 = vrot.lane.b32.xlu0 %v377, 96
    %v405 = vpop.permute.xlu0 %404
    %v410 = vadd.f32 %v394, %v399
    %v411 = vadd.f32 %v395, %v401
    %v412 = vadd.f32 %v396, %v403
    %v413 = vadd.f32 %v397, %v405
    %414 = vrot.lane.b32.xlu0 %v374, 80
    %v415 = vpop.permute.xlu0 %414
    %416 = vrot.lane.b32.xlu0 %v375, 80
    %v417 = vpop.permute.xlu0 %416
    %418 = vrot.lane.b32.xlu0 %v376, 80
    %v419 = vpop.permute.xlu0 %418
    %420 = vrot.lane.b32.xlu0 %v377, 80
    %v421 = vpop.permute.xlu0 %420
    %v426 = vadd.f32 %v410, %v415
    %v427 = vadd.f32 %v411, %v417
    %v428 = vadd.f32 %v412, %v419
    %v429 = vadd.f32 %v413, %v421
    %v431 = vsel %vm118, %v426, 0
    %v434 = vsel %vm118, %v427, 0
    %v437 = vsel %vm118, %v428, 0
    %v440 = vsel %vm118, %v429, 0
    %442 = vmatprep.subr.mxu0 0.0
    %443 = vmatpush1.msra.mxu0 %v60
    %444 = vmatprep.subr.mxu0 0.0
    %445 = vmatpush1.msra.mxu0 %v61
    %446 = vmatprep.subr.mxu0 0.0
    %447 = vmatpush1.msra.mxu0 0.0
    %448 = vmatprep.subr.mxu0 0.0
    %449 = vmatpush1.msra.mxu0 0.0
    %450 = vmatprep.subr.mxu0 0.0
    %451 = vmatpush1.msra.mxu0 0.0
    %452 = vmatprep.subr.mxu0 0.0
    %453 = vmatpush1.msra.mxu0 0.0
    %454 = vmatprep.subr.mxu0 0.0
    %455 = vmatpush1.msra.mxu0 0.0
    %456 = vmatprep.subr.mxu0 0.0
    %457 = vmatpush1.msra.mxu0 0.0
    %458 = vmatprep.subr.mxu0 0.0
    %459 = vmatpush1.msra.mxu0 0.0
    %460 = vmatprep.subr.mxu0 0.0
    %461 = vmatpush1.msra.mxu0 0.0
    %462 = vmatprep.subr.mxu0 0.0
    %463 = vmatpush1.msra.mxu0 0.0
    %464 = vmatprep.subr.mxu0 0.0
    %465 = vmatpush1.msra.mxu0 0.0
    %466 = vmatprep.subr.mxu0 0.0
    %467 = vmatpush1.msra.mxu0 0.0
    %468 = vmatprep.subr.mxu0 0.0
    %469 = vmatpush1.msra.mxu0 0.0
    %470 = vmatprep.subr.mxu0 0.0
    %471 = vmatpush1.msra.mxu0 0.0
    %472 = vmatprep.subr.mxu0 0.0
    %473 = vmatpush1.msra.mxu0 0.0
    %474 = vmatprep.subr.mxu0 0.0
    %475 = vmatpush1.msra.mxu0 0.0
    %476 = vmatprep.subr.mxu0 0.0
    %477 = vmatpush1.msra.mxu0 0.0
    %478 = vmatprep.subr.mxu0 0.0
    %479 = vmatpush1.msra.mxu0 0.0
    %480 = vmatprep.subr.mxu0 0.0
    %481 = vmatpush1.msra.mxu0 0.0
    %482 = vmatprep.subr.mxu0 0.0
    %483 = vmatpush1.msra.mxu0 0.0
    %484 = vmatprep.subr.mxu0 0.0
    %485 = vmatpush1.msra.mxu0 0.0
    %486 = vmatprep.subr.mxu0 0.0
    %487 = vmatpush1.msra.mxu0 0.0
    %488 = vmatprep.subr.mxu0 0.0
    %489 = vmatpush1.msra.mxu0 0.0
    %490 = vmatprep.subr.mxu0 0.0
    %491 = vmatpush1.msra.mxu0 0.0
    %492 = vmatprep.subr.mxu0 0.0
    %493 = vmatpush1.msra.mxu0 0.0
    %494 = vmatprep.subr.mxu0 0.0
    %495 = vmatpush1.msra.mxu0 0.0
    %496 = vmatprep.subr.mxu0 0.0
    %497 = vmatpush1.msra.mxu0 0.0
    %498 = vmatprep.subr.mxu0 0.0
    %499 = vmatpush1.msra.mxu0 0.0
    %500 = vmatprep.subr.mxu0 0.0
    %501 = vmatpush1.msra.mxu0 0.0
    %502 = vmatprep.subr.mxu0 0.0
    %503 = vmatpush1.msra.mxu0 0.0
    %504 = vmatprep.subr.mxu0 0.0
    %505 = vmatpush1.msra.mxu0 0.0
    %506 = vmatprep.mubr.f32.mxu0 0.0
    %507 = vmatmul.mubr.f32.gmra.mrb[0].mxu0 %v431
    %v508 = vpop.f32.mrb[0].mxu0
    %v509 = vadd.f32 0.0, %v508
    %v510 = vpop.f32.mrb[0].mxu0
    %511 = vmatprep.mubr.f32.mxu0 0.0
    %512 = vmatmul.mubr.f32.gmra.mrb[0].mxu0 %v434
    %v513 = vpop.f32.mrb[0].mxu0
    %v514 = vadd.f32 0.0, %v513
    %v515 = vpop.f32.mrb[0].mxu0
    %516 = vmatprep.mubr.f32.mxu0 0.0
    %517 = vmatmul.mubr.f32.gmra.mrb[0].mxu0 %v437
    %v518 = vpop.f32.mrb[0].mxu0
    %v519 = vadd.f32 0.0, %v518
    %v520 = vpop.f32.mrb[0].mxu0
    %521 = vmatprep.mubr.f32.mxu0 0.0
    %522 = vmatmul.mubr.f32.gmra.mrb[0].mxu0 %v440
    %v523 = vpop.f32.mrb[0].mxu0
    %v524 = vadd.f32 0.0, %v523
    %v525 = vpop.f32.mrb[0].mxu0
    %526 = vdwg.mxu0
    %v527 = vmax.f32 %v356, %v509
    %v528 = vmax.f32 %v361, %v514
    %v529 = vmax.f32 %v366, %v519
    %v530 = vmax.f32 %v371, %v524
    %v531 = vsub.f32 %v356, %v509
    %v532 = vsub.f32 %v361, %v514
    %v533 = vsub.f32 %v366, %v519
    %v534 = vsub.f32 %v371, %v524
    %v535 = vmax.f32 %v531, 0.0
    %v536 = vmax.f32 %v532, 0.0
    %v537 = vmax.f32 %v533, 0.0
    %v538 = vmax.f32 %v534, 0.0
    %v539 = vadd.f32 %v527, %v535
    %v540 = vadd.f32 %v528, %v536
    %v541 = vadd.f32 %v529, %v537
    %v542 = vadd.f32 %v530, %v538
    %543 = vst.msk [vmem:[%s5] sm:$0xff] %vm216, %v539
    %544 = vst.msk [vmem:[%s5 + $0x8] sm:$0xff] %vm216, %v540
    %545 = vst.msk [vmem:[%s5 + $0x10] sm:$0xff] %vm216, %v541
    %546 = vst.msk [vmem:[%s5 + $0x18] sm:$0xff] %vm216, %v542
    // Predicated region
    $region30: #{tpu_custom_call.1} parent=1 // pred_check
      _
    $region31: #{tpu_custom_call.1} parent=1 // pred_check_branch
      %548 = sbr.rel (0) target = $region33
    $region32: #{tpu_custom_call.1} parent=1 // pred_region
      _
    $region33: #{tpu_custom_call.1} parent=1 // pred_fallthru
      _
    // Predicated region
    $region34: #{tpu_custom_call.1} parent=1 // pred_check
      _
    $region35: #{tpu_custom_call.1} parent=1 // pred_check_branch
      %550 = sbr.rel (0) target = $region37
    $region36: #{tpu_custom_call.1} parent=1 // pred_region
      _
    $region37: #{tpu_custom_call.1} parent=1 // pred_fallthru
      _
    // Predicated region
    $region38: #{tpu_custom_call.1} parent=1 // pred_check
      _
    $region39: #{tpu_custom_call.1} parent=1 // pred_check_branch
      %552 = sbr.rel (0) target = $region41
    $region40: #{tpu_custom_call.1} parent=1 // pred_region
      _
    $region41: #{tpu_custom_call.1} parent=1 // pred_fallthru
      _
    // Predicated region
    $region42: #{tpu_custom_call.1} parent=1 // pred_check
      _
    $region43: #{tpu_custom_call.1} parent=1 // pred_check_branch
      %554 = sbr.rel (0) target = $region45
    $region44: #{tpu_custom_call.1} parent=1 // pred_region
      _
    $region45: #{tpu_custom_call.1} parent=1 // pred_fallthru
      _
    %555 = vsyncpa [#allocation3], 1
    %556 = vsyncpa [#allocation5], 1

</llo_original>
